<compile_context>
chip_gen: v7x
topology: tpu7x:2x2x1
jax: 0.10.0
libtpu: 0.0.40
codegen_flags: <defaults>
</compile_context>

<pallas_src>
import functools

import jax
import jax.numpy as jnp
from jax import lax
from jax.experimental import pallas as pl
from jax.experimental.pallas import tpu as pltpu

_LANES = 128
_ROW_ALIGN = 32            # sublane multiple safe for f32 / bf16 / int8 blocks
_DEFAULT_BLOCK_ROWS = 4096  # 2 MiB f32 per input block
_NUM_CORES = 2              # leading "parallel" axis (v7x megacore split)
_SENTINEL = -1.0e30         # finite stand-in for -inf


def _cdiv(a: int, b: int) -> int:
    return -(-a // b)


def _round_up(a: int, b: int) -> int:
    return _cdiv(a, b) * b


def _circle_loss_kernel(sp_ref, sn_ref, m_p_ref, l_p_ref, m_n_ref, l_n_ref, *,
                        gamma: float, steps: int, block_rows: int,
                        blocks_p: int, blocks_n: int,
                        tail_p: int, tail_n: int):
    c = pl.program_id(0)            # core / outer-parallel index
    i = pl.program_id(1)            # step within this core
    g = c * steps + i               # global row-block index handled this step

    @pl.when(i == 0)
    def _init():
        for m_ref, l_ref in ((m_p_ref, l_p_ref), (m_n_ref, l_n_ref)):
            m_ref[...] = jnp.full(m_ref.shape, _SENTINEL, m_ref.dtype)
            l_ref[...] = jnp.zeros(l_ref.shape, l_ref.dtype)

    groups = block_rows // 8

    def _merge(logit, m_ref, l_ref):
        # Reduce the (block_rows, 128) block to a per-vreg (8, 128) partial
        # (pure VPU tree max + one block-wide exp), then fold it into the
        # running state with a single small (8, 128) exp.
        lg = logit.reshape(groups, 8, _LANES)
        blk_m = jnp.max(lg, axis=0)
        blk_l = jnp.sum(jnp.exp(lg - blk_m[None, :, :]), axis=0)
        m_old = m_ref[...]
        d = blk_m - m_old
        e = jnp.exp(-jnp.abs(d))
        l_ref[...] = jnp.where(d > 0, l_ref[...] * e + blk_l,
                               l_ref[...] + blk_l * e)
        m_ref[...] = jnp.maximum(m_old, blk_m)

    def _stream(x_ref, m_ref, l_ref, blocks_x, tail_x, positive):
        if blocks_x == 0:           # statically empty stream
            return

        def _body(masked):
            x = x_ref[...].astype(jnp.float32)
            if positive:
                logit = (-gamma) * jnp.maximum(2.0 - x, 0.0) * x
            else:
                logit = gamma * jnp.maximum(x + 2.0, 0.0) * x
            if masked:
                r = lax.broadcasted_iota(jnp.int32, (block_rows, _LANES), 0)
                l_ = lax.broadcasted_iota(jnp.int32, (block_rows, _LANES), 1)
                logit = jnp.where(r * _LANES + l_ < tail_x, logit, _SENTINEL)
            _merge(logit, m_ref, l_ref)

        if tail_x == block_rows * _LANES:
            # Stream length is an exact multiple of the block: never mask.
            @pl.when(g < blocks_x)
            def _():
                _body(masked=False)
        else:
            @pl.when(g < blocks_x - 1)          # full blocks: fast path
            def _():
                _body(masked=False)

            @pl.when(g == blocks_x - 1)         # ragged final block
            def _():
                _body(masked=True)

    _stream(sp_ref, m_p_ref, l_p_ref, blocks_p, tail_p, True)
    _stream(sn_ref, m_n_ref, l_n_ref, blocks_n, tail_n, False)


def _prep(x: jax.Array, br: int):
    """Flatten and reshape to (cdiv(n,128), 128); pad only the ragged tail."""
    n = int(x.size)
    if n == 0:
        # Degenerate stream: dummy block, zero row-blocks (kernel never uses it).
        return jnp.zeros((br, _LANES), x.dtype), 0, br * _LANES
    x = jnp.ravel(x)
    rows = _cdiv(n, _LANES)
    blocks = _cdiv(rows, br)
    pad = rows * _LANES - n
    if pad:
        x = jnp.pad(x, (0, pad))        # <=127 elements; only for ragged sizes
    tail = n - (blocks - 1) * br * _LANES    # valid elements in the last block
    return x.reshape(rows, _LANES), blocks, tail


def circle_loss(sp: jax.Array, sn: jax.Array, *, m: float, gamma: float,
                block_rows: int = _DEFAULT_BLOCK_ROWS) -> jax.Array:
    """Pallas TPU implementation of CircleLoss.forward(sp, sn)."""
    del m  # stored by the module; unused by the forward pass

    p_len, n_len = int(sp.size), int(sn.size)
    rows_needed = max(_cdiv(max(p_len, 1), _LANES),
                      _cdiv(max(n_len, 1), _LANES))
    br = min(_round_up(block_rows, _ROW_ALIGN),
             _round_up(rows_needed, _ROW_ALIGN))

    sp2, blocks_p, tail_p = _prep(sp, br)
    sn2, blocks_n, tail_n = _prep(sn, br)

    total_blocks = max(blocks_p, blocks_n, 1)
    steps = _cdiv(total_blocks, _NUM_CORES)

    # Clamp block indices for the shorter / exhausted stream; its extra grid
    # steps are skipped inside the kernel, and the repeated index avoids a
    # redundant DMA re-fetch.
    bp_clamp = max(blocks_p, 1) - 1
    bn_clamp = max(blocks_n, 1) - 1
    sp_map = lambda c, i: (jnp.minimum(c * steps + i, bp_clamp), 0)
    sn_map = lambda c, i: (jnp.minimum(c * steps + i, bn_clamp), 0)

    kernel = functools.partial(
        _circle_loss_kernel, gamma=float(gamma), steps=steps, block_rows=br,
        blocks_p=blocks_p, blocks_n=blocks_n, tail_p=tail_p, tail_n=tail_n)

    part_shape = jax.ShapeDtypeStruct((_NUM_CORES, 8, _LANES), jnp.float32)
    part_spec = pl.BlockSpec((None, 8, _LANES), lambda c, i: (c, 0, 0))

    m_p, l_p, m_n, l_n = pl.pallas_call(
        kernel,
        out_shape=(part_shape, part_shape, part_shape, part_shape),
        grid_spec=pltpu.PrefetchScalarGridSpec(
            num_scalar_prefetch=0,
            grid=(_NUM_CORES, steps),
            in_specs=[
                pl.BlockSpec((br, _LANES), sp_map),
                pl.BlockSpec((br, _LANES), sn_map),
            ],
            out_specs=(part_spec, part_spec, part_spec, part_spec),
        ),
        compiler_params=pltpu.CompilerParams(
            dimension_semantics=("parallel", "arbitrary")),
    )(sp2, sn2)

    # Tiny epilogue: combine the per-core (8,128) online-LSE partials.
    def _combine(m_part, l_part):
        gm = jnp.max(m_part)
        return gm + jnp.log(jnp.sum(l_part * jnp.exp(m_part - gm)))

    return _combine(m_n, l_n) + _combine(m_p, l_p)


def circle_loss_ref(sp, sn, *, m: float, gamma: float):
    """Pure-JAX reference mirroring the PyTorch module (for verification)."""
    del m
    sp = sp.astype(jnp.float32)
    sn = sn.astype(jnp.float32)
    ap = jnp.maximum(-sp + 2.0, 0.0)
    an = jnp.maximum(sn + 2.0, 0.0)
    logit_p = -ap * sp * gamma
    logit_n = an * sn * gamma
    return (jax.scipy.special.logsumexp(logit_n, axis=0)
            + jax.scipy.special.logsumexp(logit_p, axis=0))


if __name__ == "__main__":
    m_param, gamma_param = 0.25, 32.0
    key = jax.random.PRNGKey(0)
    k1, k2, k3, k4 = jax.random.split(key, 4)

    # Case 1: lane-aligned sizes (no wrapper pad copy at all).
    sp_a = jax.random.uniform(k1, (256,), jnp.float32, minval=-1.0, maxval=1.0)
    sn_a = jax.random.uniform(k2, (128,), jnp.float32, minval=-1.0, maxval=1.0)
    # Case 2: ragged sizes with a forced small block height so the multi-block
    # grid, stream-exhausted skip, tail masking and 2-way core split all run.
    sp_b = jax.random.uniform(k3, (300,), jnp.float32, minval=-1.0, maxval=1.0)
    sn_b = jax.random.uniform(k4, (9000,), jnp.float32, minval=-1.0, maxval=1.0)

    cases = [
        (sp_a, sn_a, {}),
        (sp_b, sn_b, {"block_rows": 32}),
    ]
    for sp_x, sn_x, kw in cases:
        loss = circle_loss(sp_x, sn_x, m=m_param, gamma=gamma_param, **kw)
        jax.block_until_ready(loss)
        ref = circle_loss_ref(sp_x, sn_x, m=m_param, gamma=gamma_param)
        assert jnp.allclose(loss, ref, rtol=1e-4, atol=1e-4), (loss, ref)

    print("KERNEL_OK")
</pallas_src>

<mosaic_0001>
module attributes {stable_mosaic.version = 11 : i64} {
  func.func @_circle_loss_kernel(%arg0: i32, %arg1: i32, %arg2: memref<32x128xf32, #tpu.memory_space<vmem>>, %arg3: memref<32x128xf32, #tpu.memory_space<vmem>>, %arg4: memref<1x8x128xf32, #tpu.memory_space<vmem>>, %arg5: memref<1x8x128xf32, #tpu.memory_space<vmem>>, %arg6: memref<1x8x128xf32, #tpu.memory_space<vmem>>, %arg7: memref<1x8x128xf32, #tpu.memory_space<vmem>>) attributes {dimension_semantics = [#tpu.dimension_semantics<parallel>, #tpu.dimension_semantics<arbitrary>], iteration_bounds = array<i64: 2, 1>, scalar_prefetch = 0 : i64, scratch_operands = 0 : i64, tpu.core_type = #tpu.core_type<tc>, window_params = [{transform_indices = @transform_0, window_bounds = array<i64: 32, 128>}, {transform_indices = @transform_1, window_bounds = array<i64: 32, 128>}, {transform_indices = @transform_2, window_bounds = array<i64: 1, 8, 128>}, {transform_indices = @transform_3, window_bounds = array<i64: 1, 8, 128>}, {transform_indices = @transform_4, window_bounds = array<i64: 1, 8, 128>}, {transform_indices = @transform_5, window_bounds = array<i64: 1, 8, 128>}]} {
    %c1_i32 = arith.constant 1 : i32
    %0 = arith.muli %arg0, %c1_i32 : i32
    %1 = arith.addi %0, %arg1 : i32
    %c0_i32 = arith.constant 0 : i32
    %2 = arith.cmpi eq, %arg1, %c0_i32 : i32
    %3 = arith.extui %2 : i1 to i32
    %c0_i32_0 = arith.constant 0 : i32
    %4 = arith.cmpi ne, %3, %c0_i32_0 : i32
    scf.if %4 {
      %cst = arith.constant -1.000000e+30 : f32
      %17 = vector.broadcast %cst : f32 to vector<8x128xf32>
      %c0 = arith.constant 0 : index
      %c0_9 = arith.constant 0 : index
      %c0_10 = arith.constant 0 : index
      %18 = vector.load %arg4[%c0, %c0_9, %c0_10] : memref<1x8x128xf32, #tpu.memory_space<vmem>>, vector<1x8x128xf32>
      %19 = vector.shape_cast %18 : vector<1x8x128xf32> to vector<8x128xf32>
      %20 = vector.shape_cast %17 : vector<8x128xf32> to vector<1x8x128xf32>
      tpu.vector_store %arg4[%c0, %c0_9, %c0_10], %20 {strides = array<i32>} : memref<1x8x128xf32, #tpu.memory_space<vmem>>, vector<1x8x128xf32>,
      %cst_11 = arith.constant 0.000000e+00 : f32
      %21 = vector.broadcast %cst_11 : f32 to vector<8x128xf32>
      %c0_12 = arith.constant 0 : index
      %c0_13 = arith.constant 0 : index
      %c0_14 = arith.constant 0 : index
      %22 = vector.load %arg5[%c0_12, %c0_13, %c0_14] : memref<1x8x128xf32, #tpu.memory_space<vmem>>, vector<1x8x128xf32>
      %23 = vector.shape_cast %22 : vector<1x8x128xf32> to vector<8x128xf32>
      %24 = vector.shape_cast %21 : vector<8x128xf32> to vector<1x8x128xf32>
      tpu.vector_store %arg5[%c0_12, %c0_13, %c0_14], %24 {strides = array<i32>} : memref<1x8x128xf32, #tpu.memory_space<vmem>>, vector<1x8x128xf32>,
      %cst_15 = arith.constant -1.000000e+30 : f32
      %25 = vector.broadcast %cst_15 : f32 to vector<8x128xf32>
      %c0_16 = arith.constant 0 : index
      %c0_17 = arith.constant 0 : index
      %c0_18 = arith.constant 0 : index
      %26 = vector.load %arg6[%c0_16, %c0_17, %c0_18] : memref<1x8x128xf32, #tpu.memory_space<vmem>>, vector<1x8x128xf32>
      %27 = vector.shape_cast %26 : vector<1x8x128xf32> to vector<8x128xf32>
      %28 = vector.shape_cast %25 : vector<8x128xf32> to vector<1x8x128xf32>
      tpu.vector_store %arg6[%c0_16, %c0_17, %c0_18], %28 {strides = array<i32>} : memref<1x8x128xf32, #tpu.memory_space<vmem>>, vector<1x8x128xf32>,
      %cst_19 = arith.constant 0.000000e+00 : f32
      %29 = vector.broadcast %cst_19 : f32 to vector<8x128xf32>
      %c0_20 = arith.constant 0 : index
      %c0_21 = arith.constant 0 : index
      %c0_22 = arith.constant 0 : index
      %30 = vector.load %arg7[%c0_20, %c0_21, %c0_22] : memref<1x8x128xf32, #tpu.memory_space<vmem>>, vector<1x8x128xf32>
      %31 = vector.shape_cast %30 : vector<1x8x128xf32> to vector<8x128xf32>
      %32 = vector.shape_cast %29 : vector<8x128xf32> to vector<1x8x128xf32>
      tpu.vector_store %arg7[%c0_20, %c0_21, %c0_22], %32 {strides = array<i32>} : memref<1x8x128xf32, #tpu.memory_space<vmem>>, vector<1x8x128xf32>,
    } else {
    }
    %c0_i32_1 = arith.constant 0 : i32
    %5 = arith.cmpi slt, %1, %c0_i32_1 : i32
    %6 = arith.extui %5 : i1 to i32
    %c0_i32_2 = arith.constant 0 : i32
    %7 = arith.cmpi ne, %6, %c0_i32_2 : i32
    scf.if %7 {
      %c0 = arith.constant 0 : index
      %c0_9 = arith.constant 0 : index
      %17 = vector.load %arg2[%c0, %c0_9] : memref<32x128xf32, #tpu.memory_space<vmem>>, vector<32x128xf32>
      %cst = arith.constant 2.000000e+00 : f32
      %18 = vector.broadcast %cst : f32 to vector<32x128xf32>
      %19 = arith.subf %18, %17 : vector<32x128xf32>
      %cst_10 = arith.constant 0.000000e+00 : f32
      %20 = vector.broadcast %cst_10 : f32 to vector<32x128xf32>
      %21 = arith.maximumf %19, %20 : vector<32x128xf32>
      %cst_11 = arith.constant -3.200000e+01 : f32
      %22 = vector.broadcast %cst_11 : f32 to vector<32x128xf32>
      %23 = arith.mulf %22, %21 : vector<32x128xf32>
      %24 = arith.mulf %23, %17 : vector<32x128xf32>
      %25 = vector.shape_cast %24 : vector<32x128xf32> to vector<4x8x128xf32>
      %cst_12 = arith.constant dense<0xFF800000> : vector<8x128xf32>
      %26 = vector.multi_reduction <maximumf>, %25, %cst_12 [0] : vector<4x8x128xf32> to vector<8x128xf32>
      %27 = vector.shape_cast %26 : vector<8x128xf32> to vector<1x8x128xf32>
      %28 = vector.broadcast %27 : vector<1x8x128xf32> to vector<4x8x128xf32>
      %29 = arith.subf %25, %28 : vector<4x8x128xf32>
      %30 = math.exp %29 : vector<4x8x128xf32>
      %cst_13 = arith.constant dense<0.000000e+00> : vector<8x128xf32>
      %31 = vector.multi_reduction <add>, %30, %cst_13 [0] : vector<4x8x128xf32> to vector<8x128xf32>
      %c0_14 = arith.constant 0 : index
      %c0_15 = arith.constant 0 : index
      %c0_16 = arith.constant 0 : index
      %32 = vector.load %arg4[%c0_14, %c0_15, %c0_16] : memref<1x8x128xf32, #tpu.memory_space<vmem>>, vector<1x8x128xf32>
      %33 = vector.shape_cast %32 : vector<1x8x128xf32> to vector<8x128xf32>
      %34 = arith.subf %26, %33 : vector<8x128xf32>
      %35 = math.absf %34 : vector<8x128xf32>
      %cst_17 = arith.constant 0.000000e+00 : f32
      %36 = vector.broadcast %cst_17 : f32 to vector<8x128xf32>
      %37 = arith.subf %36, %35 : vector<8x128xf32>
      %38 = math.exp %37 : vector<8x128xf32>
      %cst_18 = arith.constant 0.000000e+00 : f32
      %39 = vector.broadcast %cst_18 : f32 to vector<8x128xf32>
      %40 = arith.cmpf ogt, %34, %39 : vector<8x128xf32>
      %c0_19 = arith.constant 0 : index
      %c0_20 = arith.constant 0 : index
      %c0_21 = arith.constant 0 : index
      %41 = vector.load %arg5[%c0_19, %c0_20, %c0_21] : memref<1x8x128xf32, #tpu.memory_space<vmem>>, vector<1x8x128xf32>
      %42 = vector.shape_cast %41 : vector<1x8x128xf32> to vector<8x128xf32>
      %43 = arith.mulf %42, %38 : vector<8x128xf32>
      %44 = arith.addf %43, %31 : vector<8x128xf32>
      %c0_22 = arith.constant 0 : index
      %c0_23 = arith.constant 0 : index
      %c0_24 = arith.constant 0 : index
      %45 = vector.load %arg5[%c0_22, %c0_23, %c0_24] : memref<1x8x128xf32, #tpu.memory_space<vmem>>, vector<1x8x128xf32>
      %46 = vector.shape_cast %45 : vector<1x8x128xf32> to vector<8x128xf32>
      %47 = arith.mulf %31, %38 : vector<8x128xf32>
      %48 = arith.addf %46, %47 : vector<8x128xf32>
      %49 = arith.select %40, %44, %48 : vector<8x128xi1>, vector<8x128xf32>
      %c0_25 = arith.constant 0 : index
      %c0_26 = arith.constant 0 : index
      %c0_27 = arith.constant 0 : index
      %50 = vector.load %arg5[%c0_25, %c0_26, %c0_27] : memref<1x8x128xf32, #tpu.memory_space<vmem>>, vector<1x8x128xf32>
      %51 = vector.shape_cast %50 : vector<1x8x128xf32> to vector<8x128xf32>
      %52 = vector.shape_cast %49 : vector<8x128xf32> to vector<1x8x128xf32>
      tpu.vector_store %arg5[%c0_25, %c0_26, %c0_27], %52 {strides = array<i32>} : memref<1x8x128xf32, #tpu.memory_space<vmem>>, vector<1x8x128xf32>,
      %53 = arith.maximumf %33, %26 : vector<8x128xf32>
      %c0_28 = arith.constant 0 : index
      %c0_29 = arith.constant 0 : index
      %c0_30 = arith.constant 0 : index
      %54 = vector.load %arg4[%c0_28, %c0_29, %c0_30] : memref<1x8x128xf32, #tpu.memory_space<vmem>>, vector<1x8x128xf32>
      %55 = vector.shape_cast %54 : vector<1x8x128xf32> to vector<8x128xf32>
      %56 = vector.shape_cast %53 : vector<8x128xf32> to vector<1x8x128xf32>
      tpu.vector_store %arg4[%c0_28, %c0_29, %c0_30], %56 {strides = array<i32>} : memref<1x8x128xf32, #tpu.memory_space<vmem>>, vector<1x8x128xf32>,
    } else {
    }
    %c0_i32_3 = arith.constant 0 : i32
    %8 = arith.cmpi eq, %1, %c0_i32_3 : i32
    %9 = arith.extui %8 : i1 to i32
    %c0_i32_4 = arith.constant 0 : i32
    %10 = arith.cmpi ne, %9, %c0_i32_4 : i32
    scf.if %10 {
      %c0 = arith.constant 0 : index
      %c0_9 = arith.constant 0 : index
      %17 = vector.load %arg2[%c0, %c0_9] : memref<32x128xf32, #tpu.memory_space<vmem>>, vector<32x128xf32>
      %cst = arith.constant 2.000000e+00 : f32
      %18 = vector.broadcast %cst : f32 to vector<32x128xf32>
      %19 = arith.subf %18, %17 : vector<32x128xf32>
      %cst_10 = arith.constant 0.000000e+00 : f32
      %20 = vector.broadcast %cst_10 : f32 to vector<32x128xf32>
      %21 = arith.maximumf %19, %20 : vector<32x128xf32>
      %cst_11 = arith.constant -3.200000e+01 : f32
      %22 = vector.broadcast %cst_11 : f32 to vector<32x128xf32>
      %23 = arith.mulf %22, %21 : vector<32x128xf32>
      %24 = arith.mulf %23, %17 : vector<32x128xf32>
      %25 = tpu.iota {dimensions = array<i32: 0>} : vector<32x128xi32>
      %26 = tpu.iota {dimensions = array<i32: 1>} : vector<32x128xi32>
      %c128_i32 = arith.constant 128 : i32
      %27 = vector.broadcast %c128_i32 : i32 to vector<32x128xi32>
      %28 = arith.muli %25, %27 : vector<32x128xi32>
      %29 = arith.addi %28, %26 : vector<32x128xi32>
      %c256_i32 = arith.constant 256 : i32
      %30 = vector.broadcast %c256_i32 : i32 to vector<32x128xi32>
      %31 = arith.cmpi slt, %29, %30 : vector<32x128xi32>
      %cst_12 = arith.constant -1.000000e+30 : f32
      %32 = vector.broadcast %cst_12 : f32 to vector<32x128xf32>
      %33 = arith.select %31, %24, %32 : vector<32x128xi1>, vector<32x128xf32>
      %34 = vector.shape_cast %33 : vector<32x128xf32> to vector<4x8x128xf32>
      %cst_13 = arith.constant dense<0xFF800000> : vector<8x128xf32>
      %35 = vector.multi_reduction <maximumf>, %34, %cst_13 [0] : vector<4x8x128xf32> to vector<8x128xf32>
      %36 = vector.shape_cast %35 : vector<8x128xf32> to vector<1x8x128xf32>
      %37 = vector.broadcast %36 : vector<1x8x128xf32> to vector<4x8x128xf32>
      %38 = arith.subf %34, %37 : vector<4x8x128xf32>
      %39 = math.exp %38 : vector<4x8x128xf32>
      %cst_14 = arith.constant dense<0.000000e+00> : vector<8x128xf32>
      %40 = vector.multi_reduction <add>, %39, %cst_14 [0] : vector<4x8x128xf32> to vector<8x128xf32>
      %c0_15 = arith.constant 0 : index
      %c0_16 = arith.constant 0 : index
      %c0_17 = arith.constant 0 : index
      %41 = vector.load %arg4[%c0_15, %c0_16, %c0_17] : memref<1x8x128xf32, #tpu.memory_space<vmem>>, vector<1x8x128xf32>
      %42 = vector.shape_cast %41 : vector<1x8x128xf32> to vector<8x128xf32>
      %43 = arith.subf %35, %42 : vector<8x128xf32>
      %44 = math.absf %43 : vector<8x128xf32>
      %cst_18 = arith.constant 0.000000e+00 : f32
      %45 = vector.broadcast %cst_18 : f32 to vector<8x128xf32>
      %46 = arith.subf %45, %44 : vector<8x128xf32>
      %47 = math.exp %46 : vector<8x128xf32>
      %cst_19 = arith.constant 0.000000e+00 : f32
      %48 = vector.broadcast %cst_19 : f32 to vector<8x128xf32>
      %49 = arith.cmpf ogt, %43, %48 : vector<8x128xf32>
      %c0_20 = arith.constant 0 : index
      %c0_21 = arith.constant 0 : index
      %c0_22 = arith.constant 0 : index
      %50 = vector.load %arg5[%c0_20, %c0_21, %c0_22] : memref<1x8x128xf32, #tpu.memory_space<vmem>>, vector<1x8x128xf32>
      %51 = vector.shape_cast %50 : vector<1x8x128xf32> to vector<8x128xf32>
      %52 = arith.mulf %51, %47 : vector<8x128xf32>
      %53 = arith.addf %52, %40 : vector<8x128xf32>
      %c0_23 = arith.constant 0 : index
      %c0_24 = arith.constant 0 : index
      %c0_25 = arith.constant 0 : index
      %54 = vector.load %arg5[%c0_23, %c0_24, %c0_25] : memref<1x8x128xf32, #tpu.memory_space<vmem>>, vector<1x8x128xf32>
      %55 = vector.shape_cast %54 : vector<1x8x128xf32> to vector<8x128xf32>
      %56 = arith.mulf %40, %47 : vector<8x128xf32>
      %57 = arith.addf %55, %56 : vector<8x128xf32>
      %58 = arith.select %49, %53, %57 : vector<8x128xi1>, vector<8x128xf32>
      %c0_26 = arith.constant 0 : index
      %c0_27 = arith.constant 0 : index
      %c0_28 = arith.constant 0 : index
      %59 = vector.load %arg5[%c0_26, %c0_27, %c0_28] : memref<1x8x128xf32, #tpu.memory_space<vmem>>, vector<1x8x128xf32>
      %60 = vector.shape_cast %59 : vector<1x8x128xf32> to vector<8x128xf32>
      %61 = vector.shape_cast %58 : vector<8x128xf32> to vector<1x8x128xf32>
      tpu.vector_store %arg5[%c0_26, %c0_27, %c0_28], %61 {strides = array<i32>} : memref<1x8x128xf32, #tpu.memory_space<vmem>>, vector<1x8x128xf32>,
      %62 = arith.maximumf %42, %35 : vector<8x128xf32>
      %c0_29 = arith.constant 0 : index
      %c0_30 = arith.constant 0 : index
      %c0_31 = arith.constant 0 : index
      %63 = vector.load %arg4[%c0_29, %c0_30, %c0_31] : memref<1x8x128xf32, #tpu.memory_space<vmem>>, vector<1x8x128xf32>
      %64 = vector.shape_cast %63 : vector<1x8x128xf32> to vector<8x128xf32>
      %65 = vector.shape_cast %62 : vector<8x128xf32> to vector<1x8x128xf32>
      tpu.vector_store %arg4[%c0_29, %c0_30, %c0_31], %65 {strides = array<i32>} : memref<1x8x128xf32, #tpu.memory_space<vmem>>, vector<1x8x128xf32>,
    } else {
    }
    %c0_i32_5 = arith.constant 0 : i32
    %11 = arith.cmpi slt, %1, %c0_i32_5 : i32
    %12 = arith.extui %11 : i1 to i32
    %c0_i32_6 = arith.constant 0 : i32
    %13 = arith.cmpi ne, %12, %c0_i32_6 : i32
    scf.if %13 {
      %c0 = arith.constant 0 : index
      %c0_9 = arith.constant 0 : index
      %17 = vector.load %arg3[%c0, %c0_9] : memref<32x128xf32, #tpu.memory_space<vmem>>, vector<32x128xf32>
      %cst = arith.constant 2.000000e+00 : f32
      %18 = vector.broadcast %cst : f32 to vector<32x128xf32>
      %19 = arith.addf %17, %18 : vector<32x128xf32>
      %cst_10 = arith.constant 0.000000e+00 : f32
      %20 = vector.broadcast %cst_10 : f32 to vector<32x128xf32>
      %21 = arith.maximumf %19, %20 : vector<32x128xf32>
      %cst_11 = arith.constant 3.200000e+01 : f32
      %22 = vector.broadcast %cst_11 : f32 to vector<32x128xf32>
      %23 = arith.mulf %22, %21 : vector<32x128xf32>
      %24 = arith.mulf %23, %17 : vector<32x128xf32>
      %25 = vector.shape_cast %24 : vector<32x128xf32> to vector<4x8x128xf32>
      %cst_12 = arith.constant dense<0xFF800000> : vector<8x128xf32>
      %26 = vector.multi_reduction <maximumf>, %25, %cst_12 [0] : vector<4x8x128xf32> to vector<8x128xf32>
      %27 = vector.shape_cast %26 : vector<8x128xf32> to vector<1x8x128xf32>
      %28 = vector.broadcast %27 : vector<1x8x128xf32> to vector<4x8x128xf32>
      %29 = arith.subf %25, %28 : vector<4x8x128xf32>
      %30 = math.exp %29 : vector<4x8x128xf32>
      %cst_13 = arith.constant dense<0.000000e+00> : vector<8x128xf32>
      %31 = vector.multi_reduction <add>, %30, %cst_13 [0] : vector<4x8x128xf32> to vector<8x128xf32>
      %c0_14 = arith.constant 0 : index
      %c0_15 = arith.constant 0 : index
      %c0_16 = arith.constant 0 : index
      %32 = vector.load %arg6[%c0_14, %c0_15, %c0_16] : memref<1x8x128xf32, #tpu.memory_space<vmem>>, vector<1x8x128xf32>
      %33 = vector.shape_cast %32 : vector<1x8x128xf32> to vector<8x128xf32>
      %34 = arith.subf %26, %33 : vector<8x128xf32>
      %35 = math.absf %34 : vector<8x128xf32>
      %cst_17 = arith.constant 0.000000e+00 : f32
      %36 = vector.broadcast %cst_17 : f32 to vector<8x128xf32>
      %37 = arith.subf %36, %35 : vector<8x128xf32>
      %38 = math.exp %37 : vector<8x128xf32>
      %cst_18 = arith.constant 0.000000e+00 : f32
      %39 = vector.broadcast %cst_18 : f32 to vector<8x128xf32>
      %40 = arith.cmpf ogt, %34, %39 : vector<8x128xf32>
      %c0_19 = arith.constant 0 : index
      %c0_20 = arith.constant 0 : index
      %c0_21 = arith.constant 0 : index
      %41 = vector.load %arg7[%c0_19, %c0_20, %c0_21] : memref<1x8x128xf32, #tpu.memory_space<vmem>>, vector<1x8x128xf32>
      %42 = vector.shape_cast %41 : vector<1x8x128xf32> to vector<8x128xf32>
      %43 = arith.mulf %42, %38 : vector<8x128xf32>
      %44 = arith.addf %43, %31 : vector<8x128xf32>
      %c0_22 = arith.constant 0 : index
      %c0_23 = arith.constant 0 : index
      %c0_24 = arith.constant 0 : index
      %45 = vector.load %arg7[%c0_22, %c0_23, %c0_24] : memref<1x8x128xf32, #tpu.memory_space<vmem>>, vector<1x8x128xf32>
      %46 = vector.shape_cast %45 : vector<1x8x128xf32> to vector<8x128xf32>
      %47 = arith.mulf %31, %38 : vector<8x128xf32>
      %48 = arith.addf %46, %47 : vector<8x128xf32>
      %49 = arith.select %40, %44, %48 : vector<8x128xi1>, vector<8x128xf32>
      %c0_25 = arith.constant 0 : index
      %c0_26 = arith.constant 0 : index
      %c0_27 = arith.constant 0 : index
      %50 = vector.load %arg7[%c0_25, %c0_26, %c0_27] : memref<1x8x128xf32, #tpu.memory_space<vmem>>, vector<1x8x128xf32>
      %51 = vector.shape_cast %50 : vector<1x8x128xf32> to vector<8x128xf32>
      %52 = vector.shape_cast %49 : vector<8x128xf32> to vector<1x8x128xf32>
      tpu.vector_store %arg7[%c0_25, %c0_26, %c0_27], %52 {strides = array<i32>} : memref<1x8x128xf32, #tpu.memory_space<vmem>>, vector<1x8x128xf32>,
      %53 = arith.maximumf %33, %26 : vector<8x128xf32>
      %c0_28 = arith.constant 0 : index
      %c0_29 = arith.constant 0 : index
      %c0_30 = arith.constant 0 : index
      %54 = vector.load %arg6[%c0_28, %c0_29, %c0_30] : memref<1x8x128xf32, #tpu.memory_space<vmem>>, vector<1x8x128xf32>
      %55 = vector.shape_cast %54 : vector<1x8x128xf32> to vector<8x128xf32>
      %56 = vector.shape_cast %53 : vector<8x128xf32> to vector<1x8x128xf32>
      tpu.vector_store %arg6[%c0_28, %c0_29, %c0_30], %56 {strides = array<i32>} : memref<1x8x128xf32, #tpu.memory_space<vmem>>, vector<1x8x128xf32>,
    } else {
    }
    %c0_i32_7 = arith.constant 0 : i32
    %14 = arith.cmpi eq, %1, %c0_i32_7 : i32
    %15 = arith.extui %14 : i1 to i32
    %c0_i32_8 = arith.constant 0 : i32
    %16 = arith.cmpi ne, %15, %c0_i32_8 : i32
    scf.if %16 {
      %c0 = arith.constant 0 : index
      %c0_9 = arith.constant 0 : index
      %17 = vector.load %arg3[%c0, %c0_9] : memref<32x128xf32, #tpu.memory_space<vmem>>, vector<32x128xf32>
      %cst = arith.constant 2.000000e+00 : f32
      %18 = vector.broadcast %cst : f32 to vector<32x128xf32>
      %19 = arith.addf %17, %18 : vector<32x128xf32>
      %cst_10 = arith.constant 0.000000e+00 : f32
      %20 = vector.broadcast %cst_10 : f32 to vector<32x128xf32>
      %21 = arith.maximumf %19, %20 : vector<32x128xf32>
      %cst_11 = arith.constant 3.200000e+01 : f32
      %22 = vector.broadcast %cst_11 : f32 to vector<32x128xf32>
      %23 = arith.mulf %22, %21 : vector<32x128xf32>
      %24 = arith.mulf %23, %17 : vector<32x128xf32>
      %25 = tpu.iota {dimensions = array<i32: 0>} : vector<32x128xi32>
      %26 = tpu.iota {dimensions = array<i32: 1>} : vector<32x128xi32>
      %c128_i32 = arith.constant 128 : i32
      %27 = vector.broadcast %c128_i32 : i32 to vector<32x128xi32>
      %28 = arith.muli %25, %27 : vector<32x128xi32>
      %29 = arith.addi %28, %26 : vector<32x128xi32>
      %c128_i32_12 = arith.constant 128 : i32
      %30 = vector.broadcast %c128_i32_12 : i32 to vector<32x128xi32>
      %31 = arith.cmpi slt, %29, %30 : vector<32x128xi32>
      %cst_13 = arith.constant -1.000000e+30 : f32
      %32 = vector.broadcast %cst_13 : f32 to vector<32x128xf32>
      %33 = arith.select %31, %24, %32 : vector<32x128xi1>, vector<32x128xf32>
      %34 = vector.shape_cast %33 : vector<32x128xf32> to vector<4x8x128xf32>
      %cst_14 = arith.constant dense<0xFF800000> : vector<8x128xf32>
      %35 = vector.multi_reduction <maximumf>, %34, %cst_14 [0] : vector<4x8x128xf32> to vector<8x128xf32>
      %36 = vector.shape_cast %35 : vector<8x128xf32> to vector<1x8x128xf32>
      %37 = vector.broadcast %36 : vector<1x8x128xf32> to vector<4x8x128xf32>
      %38 = arith.subf %34, %37 : vector<4x8x128xf32>
      %39 = math.exp %38 : vector<4x8x128xf32>
      %cst_15 = arith.constant dense<0.000000e+00> : vector<8x128xf32>
      %40 = vector.multi_reduction <add>, %39, %cst_15 [0] : vector<4x8x128xf32> to vector<8x128xf32>
      %c0_16 = arith.constant 0 : index
      %c0_17 = arith.constant 0 : index
      %c0_18 = arith.constant 0 : index
      %41 = vector.load %arg6[%c0_16, %c0_17, %c0_18] : memref<1x8x128xf32, #tpu.memory_space<vmem>>, vector<1x8x128xf32>
      %42 = vector.shape_cast %41 : vector<1x8x128xf32> to vector<8x128xf32>
      %43 = arith.subf %35, %42 : vector<8x128xf32>
      %44 = math.absf %43 : vector<8x128xf32>
      %cst_19 = arith.constant 0.000000e+00 : f32
      %45 = vector.broadcast %cst_19 : f32 to vector<8x128xf32>
      %46 = arith.subf %45, %44 : vector<8x128xf32>
      %47 = math.exp %46 : vector<8x128xf32>
      %cst_20 = arith.constant 0.000000e+00 : f32
      %48 = vector.broadcast %cst_20 : f32 to vector<8x128xf32>
      %49 = arith.cmpf ogt, %43, %48 : vector<8x128xf32>
      %c0_21 = arith.constant 0 : index
      %c0_22 = arith.constant 0 : index
      %c0_23 = arith.constant 0 : index
      %50 = vector.load %arg7[%c0_21, %c0_22, %c0_23] : memref<1x8x128xf32, #tpu.memory_space<vmem>>, vector<1x8x128xf32>
      %51 = vector.shape_cast %50 : vector<1x8x128xf32> to vector<8x128xf32>
      %52 = arith.mulf %51, %47 : vector<8x128xf32>
      %53 = arith.addf %52, %40 : vector<8x128xf32>
      %c0_24 = arith.constant 0 : index
      %c0_25 = arith.constant 0 : index
      %c0_26 = arith.constant 0 : index
      %54 = vector.load %arg7[%c0_24, %c0_25, %c0_26] : memref<1x8x128xf32, #tpu.memory_space<vmem>>, vector<1x8x128xf32>
      %55 = vector.shape_cast %54 : vector<1x8x128xf32> to vector<8x128xf32>
      %56 = arith.mulf %40, %47 : vector<8x128xf32>
      %57 = arith.addf %55, %56 : vector<8x128xf32>
      %58 = arith.select %49, %53, %57 : vector<8x128xi1>, vector<8x128xf32>
      %c0_27 = arith.constant 0 : index
      %c0_28 = arith.constant 0 : index
      %c0_29 = arith.constant 0 : index
      %59 = vector.load %arg7[%c0_27, %c0_28, %c0_29] : memref<1x8x128xf32, #tpu.memory_space<vmem>>, vector<1x8x128xf32>
      %60 = vector.shape_cast %59 : vector<1x8x128xf32> to vector<8x128xf32>
      %61 = vector.shape_cast %58 : vector<8x128xf32> to vector<1x8x128xf32>
      tpu.vector_store %arg7[%c0_27, %c0_28, %c0_29], %61 {strides = array<i32>} : memref<1x8x128xf32, #tpu.memory_space<vmem>>, vector<1x8x128xf32>,
      %62 = arith.maximumf %42, %35 : vector<8x128xf32>
      %c0_30 = arith.constant 0 : index
      %c0_31 = arith.constant 0 : index
      %c0_32 = arith.constant 0 : index
      %63 = vector.load %arg6[%c0_30, %c0_31, %c0_32] : memref<1x8x128xf32, #tpu.memory_space<vmem>>, vector<1x8x128xf32>
      %64 = vector.shape_cast %63 : vector<1x8x128xf32> to vector<8x128xf32>
      %65 = vector.shape_cast %62 : vector<8x128xf32> to vector<1x8x128xf32>
      tpu.vector_store %arg6[%c0_30, %c0_31, %c0_32], %65 {strides = array<i32>} : memref<1x8x128xf32, #tpu.memory_space<vmem>>, vector<1x8x128xf32>,
    } else {
    }
    return
  }
  func.func @transform_0(%arg0: i32, %arg1: i32) -> (i32, i32) {
    %c1_i32 = arith.constant 1 : i32
    %0 = arith.muli %arg0, %c1_i32 : i32
    %1 = arith.addi %0, %arg1 : i32
    %c0_i32 = arith.constant 0 : i32
    %2 = arith.minsi %1, %c0_i32 : i32
    %c0_i32_0 = arith.constant 0 : i32
    %c0_i32_1 = arith.constant 0 : i32
    return %2, %c0_i32_0 : i32, i32
  }
  func.func @transform_1(%arg0: i32, %arg1: i32) -> (i32, i32) {
    %c1_i32 = arith.constant 1 : i32
    %0 = arith.muli %arg0, %c1_i32 : i32
    %1 = arith.addi %0, %arg1 : i32
    %c0_i32 = arith.constant 0 : i32
    %2 = arith.minsi %1, %c0_i32 : i32
    %c0_i32_0 = arith.constant 0 : i32
    %c0_i32_1 = arith.constant 0 : i32
    return %2, %c0_i32_0 : i32, i32
  }
  func.func @transform_2(%arg0: i32, %arg1: i32) -> (i32, i32, i32) {
    %c0_i32 = arith.constant 0 : i32
    %c0_i32_0 = arith.constant 0 : i32
    %c0_i32_1 = arith.constant 0 : i32
    return %arg0, %c0_i32, %c0_i32_0 : i32, i32, i32
  }
  func.func @transform_3(%arg0: i32, %arg1: i32) -> (i32, i32, i32) {
    %c0_i32 = arith.constant 0 : i32
    %c0_i32_0 = arith.constant 0 : i32
    %c0_i32_1 = arith.constant 0 : i32
    return %arg0, %c0_i32, %c0_i32_0 : i32, i32, i32
  }
  func.func @transform_4(%arg0: i32, %arg1: i32) -> (i32, i32, i32) {
    %c0_i32 = arith.constant 0 : i32
    %c0_i32_0 = arith.constant 0 : i32
    %c0_i32_1 = arith.constant 0 : i32
    return %arg0, %c0_i32, %c0_i32_0 : i32, i32, i32
  }
  func.func @transform_5(%arg0: i32, %arg1: i32) -> (i32, i32, i32) {
    %c0_i32 = arith.constant 0 : i32
    %c0_i32_0 = arith.constant 0 : i32
    %c0_i32_1 = arith.constant 0 : i32
    return %arg0, %c0_i32, %c0_i32_0 : i32, i32, i32
  }
}

</mosaic_0001>

<llo_original>
// kernel: tpu_custom_call.1
$region0: #{tpu_custom_call.1}
  #allocation0 [shape = 'u32[]', space=smem, size = 0x4, offset = 0x4, fixed_abs, tag = 'smem constant byte address 0x4 - core index']
  #allocation1 [shape = 'u32[144,128]{1,0:T(1,128)}', space=vmem, size = 0x12000, scoped, tag = 'internal scratch']
  %s0 = inlined_call_operand.hbm [shape: f32[2,128], index: 0, kind: input, shape index: {}]
  %s1 = inlined_call_operand.vmem [shape: f32[1,128], index: 1, kind: input, shape index: {}]
  %s2 = inlined_call_operand.hbm [shape: f32[2,8,128], index: 2, kind: output, shape index: {0}]
  %s3 = inlined_call_operand.hbm [shape: f32[2,8,128], index: 3, kind: output, shape index: {1}]
  %s4 = inlined_call_operand.hbm [shape: f32[2,8,128], index: 4, kind: output, shape index: {2}]
  %s5 = inlined_call_operand.hbm [shape: f32[2,8,128], index: 5, kind: output, shape index: {3}]
  %6 = xla_tuple %s2, %s3, %s4, %s5
  %s7 = sld [smem:[#allocation0]]
  $region89: #{tpu_custom_call.1} parent=0
    _
  %s9 = ssub.s32 1, %s7
  %s10 = scalar_select 0, %s9, %s7
  $region1: #{tpu_custom_call.1} parent=0
    #allocation2 [shape = 'u8[32768]{0}', space=vmem, size = 0x8000, scoped, tag = 'input window, operand 0']
    #allocation3 [shape = 's32[2]{0}', space=sflag, size = 0x8, scoped, tag = 'scoped memory for tpu_custom_call.1']
    #allocation4 [shape = 's32[2]{0}', space=sflag, size = 0x8, scoped, tag = 'scoped memory for tpu_custom_call.1']
    #allocation5 [shape = 'u8[8192]{0}', space=vmem, size = 0x2000, scoped, tag = 'output window, operand 0']
    #allocation6 [shape = 'u8[8192]{0}', space=vmem, size = 0x2000, scoped, tag = 'output window, operand 1']
    #allocation7 [shape = 's32[2]{0}', space=sflag, size = 0x8, scoped, tag = 'scoped memory for tpu_custom_call.1']
    #allocation8 [shape = 'u8[8192]{0}', space=vmem, size = 0x2000, scoped, tag = 'output window, operand 2']
    #allocation9 [shape = 'u8[8192]{0}', space=vmem, size = 0x2000, scoped, tag = 'output window, operand 3']
    #allocation10 [shape = 's32[2]{0}', space=sflag, size = 0x8, scoped, tag = 'scoped memory for tpu_custom_call.1']
    %11 = vsyncpa [#allocation3], 0
    %s12 = scalar_lea.sflag [#allocation3], 1
    %13 = vsyncpa %s12, 0
    %14 = vsyncpa [#allocation4], 0
    %s15 = scalar_lea.sflag [#allocation4], 1
    %16 = vsyncpa %s15, 0
    %17 = vsyncpa [#allocation7], 0
    %s18 = scalar_lea.sflag [#allocation7], 1
    %19 = vsyncpa %s18, 0
    %20 = vsyncpa [#allocation10], 0
    %s21 = scalar_lea.sflag [#allocation10], 1
    %22 = vsyncpa %s21, 0
    loop: start=0, step=1, limit=4
    $region2: #{tpu_custom_call.1} parent=1 // loop_pre_header
      _
    $region3: #{tpu_custom_call.1} parent=1 // loop_header
      %s24 = sphi 0, %s28
      %p25 = scmp.ge.s32.totalorder %s24, 4
      %s31 = sphi 0, %s43
      %s32 = sphi 0, %s39
      %s33 = sphi 0, %s31
      %s34 = sphi 0, %s32
      %s35 = sphi 0, %s33
      %s36 = sphi 0, %s34
      %s52 = sphi 0, %s54
      %s55 = sphi 0, %s52
      %s56 = sphi 0, %s55
      %s72 = sphi 0, %s56
      %s84 = sphi 0, %s86
      %s87 = sphi 0, %s84
      %s88 = sphi 0, %s87
      %s104 = sphi 0, %s88
      %s110 = sphi 0, %s112
      %s113 = sphi 0, %s110
      %s114 = sphi 0, %s113
      %s130 = sphi 0, %s114
      %s136 = sphi 0, %s138
      %s139 = sphi 0, %s136
      %s140 = sphi 0, %s139
      %s156 = sphi 0, %s140
      %s162 = sphi 0, %s164
      %s165 = sphi 0, %s162
      %s166 = sphi 0, %s165
      %s182 = sphi 0, %s166
      %s188 = sphi 0, %s190
      %s191 = sphi 0, %s188
      %s192 = sphi 0, %s191
      %s208 = sphi 0, %s192
    $region4: #{tpu_custom_call.1} parent=1 // loop_header_branch
      %27 = sbr.rel (%p25) target = $region8
    $region5: #{tpu_custom_call.1} parent=1 // loop_body
      %s29 = ssub.s32 %s24, 1
      %s30 = ssub.s32 %s24, 2
      %s37 = sadd.s32 1, %s32
      %p38 = scmp.ge.s32.totalorder %s37, 1
      %s39 = scalar_select %p38, 0, %s37
      %s40 = sadd.s32 1, %s31
      %s41 = scalar_select %p38, %s40, %s31
      %p42 = scmp.ge.s32.totalorder %s41, 2
      %s43 = scalar_select %p42, 0, %s41
      %s44 = sadd.s32 %s31, %s32
      %p45 = scmp.lt.s32.totalorder %s44, 0
      %s46 = scalar_select %p45, %s44, 0
      %s47 = sadd.s32 %s43, %s39
      %p48 = scmp.lt.s32.totalorder %s47, 0
      %s49 = scalar_select %p48, %s47, 0
      %s50 = ssub.s32 %s46, %s49
      %p51 = scmp.eq.s32.totalorder %s50, 0
      %s53 = sadd.s32 %s52, 1
      %s54 = scalar_select %p51, %s52, %s53
      %p57 = pneg %p51
      %p58 = scmp.eq.s32.totalorder %s24, 1
      %p59 = por %p57, %p58
      %p60 = scmp.ne.s32.totalorder %s52, %s55
      %p61 = scmp.eq.s32.totalorder %s24, 0
      %p62 = por %p60, %p61
      %p63 = scmp.ne.s32.totalorder %s52, %s55
      %p64 = scmp.eq.s32.totalorder %s29, 1
      %p65 = por %p63, %p64
      %p66 = scmp.ne.s32.totalorder %s55, %s56
      %p67 = scmp.eq.s32.totalorder %s29, 0
      %p68 = por %p66, %p67
      %p69 = scmp.ne.s32.totalorder %s55, %s56
      %p70 = scmp.eq.s32.totalorder %s30, 1
      %p71 = por %p69, %p70
      %p73 = scmp.ne.s32.totalorder %s56, %s72
      %p74 = scmp.eq.s32.totalorder %s30, 0
      %p75 = por %p73, %p74
      %s76 = sadd.s32 %s31, %s32
      %p77 = scmp.lt.s32.totalorder %s76, 0
      %s78 = scalar_select %p77, %s76, 0
      %s79 = sadd.s32 %s43, %s39
      %p80 = scmp.lt.s32.totalorder %s79, 0
      %s81 = scalar_select %p80, %s79, 0
      %s82 = ssub.s32 %s78, %s81
      %p83 = scmp.eq.s32.totalorder %s82, 0
      %s85 = sadd.s32 %s84, 1
      %s86 = scalar_select %p83, %s84, %s85
      %p89 = pneg %p83
      %p90 = scmp.eq.s32.totalorder %s24, 1
      %p91 = por %p89, %p90
      %p92 = scmp.ne.s32.totalorder %s84, %s87
      %p93 = scmp.eq.s32.totalorder %s24, 0
      %p94 = por %p92, %p93
      %p95 = scmp.ne.s32.totalorder %s84, %s87
      %p96 = scmp.eq.s32.totalorder %s29, 1
      %p97 = por %p95, %p96
      %p98 = scmp.ne.s32.totalorder %s87, %s88
      %p99 = scmp.eq.s32.totalorder %s29, 0
      %p100 = por %p98, %p99
      %p101 = scmp.ne.s32.totalorder %s87, %s88
      %p102 = scmp.eq.s32.totalorder %s30, 1
      %p103 = por %p101, %p102
      %p105 = scmp.ne.s32.totalorder %s88, %s104
      %p106 = scmp.eq.s32.totalorder %s30, 0
      %p107 = por %p105, %p106
      %s108 = ssub.s32 %s31, %s43
      %p109 = scmp.eq.s32.totalorder %s108, 0
      %s111 = sadd.s32 %s110, 1
      %s112 = scalar_select %p109, %s110, %s111
      %p115 = pneg %p109
      %p116 = scmp.eq.s32.totalorder %s24, 1
      %p117 = por %p115, %p116
      %p118 = scmp.ne.s32.totalorder %s110, %s113
      %p119 = scmp.eq.s32.totalorder %s24, 0
      %p120 = por %p118, %p119
      %p121 = scmp.ne.s32.totalorder %s110, %s113
      %p122 = scmp.eq.s32.totalorder %s29, 1
      %p123 = por %p121, %p122
      %p124 = scmp.ne.s32.totalorder %s113, %s114
      %p125 = scmp.eq.s32.totalorder %s29, 0
      %p126 = por %p124, %p125
      %p127 = scmp.ne.s32.totalorder %s113, %s114
      %p128 = scmp.eq.s32.totalorder %s30, 1
      %p129 = por %p127, %p128
      %p131 = scmp.ne.s32.totalorder %s114, %s130
      %p132 = scmp.eq.s32.totalorder %s30, 0
      %p133 = por %p131, %p132
      %s134 = ssub.s32 %s31, %s43
      %p135 = scmp.eq.s32.totalorder %s134, 0
      %s137 = sadd.s32 %s136, 1
      %s138 = scalar_select %p135, %s136, %s137
      %p141 = pneg %p135
      %p142 = scmp.eq.s32.totalorder %s24, 1
      %p143 = por %p141, %p142
      %p144 = scmp.ne.s32.totalorder %s136, %s139
      %p145 = scmp.eq.s32.totalorder %s24, 0
      %p146 = por %p144, %p145
      %p147 = scmp.ne.s32.totalorder %s136, %s139
      %p148 = scmp.eq.s32.totalorder %s29, 1
      %p149 = por %p147, %p148
      %p150 = scmp.ne.s32.totalorder %s139, %s140
      %p151 = scmp.eq.s32.totalorder %s29, 0
      %p152 = por %p150, %p151
      %p153 = scmp.ne.s32.totalorder %s139, %s140
      %p154 = scmp.eq.s32.totalorder %s30, 1
      %p155 = por %p153, %p154
      %p157 = scmp.ne.s32.totalorder %s140, %s156
      %p158 = scmp.eq.s32.totalorder %s30, 0
      %p159 = por %p157, %p158
      %s160 = ssub.s32 %s31, %s43
      %p161 = scmp.eq.s32.totalorder %s160, 0
      %s163 = sadd.s32 %s162, 1
      %s164 = scalar_select %p161, %s162, %s163
      %p167 = pneg %p161
      %p168 = scmp.eq.s32.totalorder %s24, 1
      %p169 = por %p167, %p168
      %p170 = scmp.ne.s32.totalorder %s162, %s165
      %p171 = scmp.eq.s32.totalorder %s24, 0
      %p172 = por %p170, %p171
      %p173 = scmp.ne.s32.totalorder %s162, %s165
      %p174 = scmp.eq.s32.totalorder %s29, 1
      %p175 = por %p173, %p174
      %p176 = scmp.ne.s32.totalorder %s165, %s166
      %p177 = scmp.eq.s32.totalorder %s29, 0
      %p178 = por %p176, %p177
      %p179 = scmp.ne.s32.totalorder %s165, %s166
      %p180 = scmp.eq.s32.totalorder %s30, 1
      %p181 = por %p179, %p180
      %p183 = scmp.ne.s32.totalorder %s166, %s182
      %p184 = scmp.eq.s32.totalorder %s30, 0
      %p185 = por %p183, %p184
      %s186 = ssub.s32 %s31, %s43
      %p187 = scmp.eq.s32.totalorder %s186, 0
      %s189 = sadd.s32 %s188, 1
      %s190 = scalar_select %p187, %s188, %s189
      %p193 = pneg %p187
      %p194 = scmp.eq.s32.totalorder %s24, 1
      %p195 = por %p193, %p194
      %p196 = scmp.ne.s32.totalorder %s188, %s191
      %p197 = scmp.eq.s32.totalorder %s24, 0
      %p198 = por %p196, %p197
      %p199 = scmp.ne.s32.totalorder %s188, %s191
      %p200 = scmp.eq.s32.totalorder %s29, 1
      %p201 = por %p199, %p200
      %p202 = scmp.ne.s32.totalorder %s191, %s192
      %p203 = scmp.eq.s32.totalorder %s29, 0
      %p204 = por %p202, %p203
      %p205 = scmp.ne.s32.totalorder %s191, %s192
      %p206 = scmp.eq.s32.totalorder %s30, 1
      %p207 = por %p205, %p206
      %p209 = scmp.ne.s32.totalorder %s192, %s208
      %p210 = scmp.eq.s32.totalorder %s30, 0
      %p211 = por %p209, %p210
      %p212 = scmp.le.s32.totalorder 1, %s24
      %p213 = scmp.lt.s32.totalorder %s24, 3
      %p214 = pnand %p212, %p213
      %p215 = pneg %p214
      // Predicated region
      $region9: #{tpu_custom_call.1} parent=5 // pred_check
        _
      $region10: #{tpu_custom_call.1} parent=5 // pred_check_branch
        %217 = sbr.rel (%p214) target = $region12
      $region11: #{tpu_custom_call.1} parent=5 // pred_region
        %s218 = ssub.s32 %s24, 1
      $region12: #{tpu_custom_call.1} parent=5 // pred_fallthru
        _
      %p219 = scmp.lt.s32.totalorder %s24, 2
      // Predicated region
      $region13: #{tpu_custom_call.1} parent=5 // pred_check
        %p220 = pneg %p219
      $region14: #{tpu_custom_call.1} parent=5 // pred_check_branch
        %222 = sbr.rel (%p220) target = $region16
      $region15: #{tpu_custom_call.1} parent=5 // pred_region
        // Predicated region
        $region17: #{tpu_custom_call.1} parent=15 // pred_check
          %p223 = pneg %p62
        $region18: #{tpu_custom_call.1} parent=15 // pred_check_branch
          %225 = sbr.rel (%p223) target = $region20
        $region19: #{tpu_custom_call.1} parent=15 // pred_region
          %s226 = sand.u32 %s52, 1
          %s227 = scalar_lea.sflag [#allocation3], %s226
          %s228 = sand.u32 %s52, 1
          %s229 = smul.addr %s228, 32
          %s230 = scalar_lea.vmem [#allocation2], %s229
          %s231 = sadd.s32 %s31, %s32
          %p232 = scmp.lt.s32.totalorder %s231, 0
          %s233 = scalar_select %p232, %s231, 0
          %s234 = smul.u32 16, %s233
          %s235 = ssub.s32 1, %s234
          %s236 = smul.u32 32, %s235
          %s238 = ssub.s32 512, %s236
          %239 = vsyncadd %s227, %s238
          %p240 = scmp.ne.s32.totalorder 0, %s236
          %s241 = smul.addr %s234, 32
          %s242 = scalar_lea.hbm %s0, %s241
          %s243 = smul.u32 2, %s235
          %s244 = sshll.u32 %s230, 4
          %s245 = int_to_ptr.vmem [resolvable:$true] %s244
          %s246 = sshll.u32 %s243, 4
          %250 = dma.hbm_to_vmem [thread:$0]  (%p240), %s242, %s246, %s245, %s227, 32, 32, 2
        $region20: #{tpu_custom_call.1} parent=15 // pred_fallthru
          _
        // Predicated region
        $region21: #{tpu_custom_call.1} parent=15 // pred_check
          %p251 = pneg %p94
        $region22: #{tpu_custom_call.1} parent=15 // pred_check_branch
          %253 = sbr.rel (%p251) target = $region24
        $region23: #{tpu_custom_call.1} parent=15 // pred_region
          %s254 = sadd.s32 %s31, %s32
          %p255 = scmp.lt.s32.totalorder %s254, 0
          %s256 = scalar_select %p255, %s254, 0
          %s257 = smul.u32 32, %s256
          %s258 = ssub.s32 1, %s257
          %s259 = smul.u32 16, %s258
          %p260 = scmp.lt.s32.totalorder %s257, 0
          %s261 = scalar_select %p260, %s257, 0
          %s262 = scalar_lea.vmem %s1, %s261
          %s263 = sadd.s32 %s31, %s32
          %p264 = scmp.lt.s32.totalorder %s263, 0
          %s265 = scalar_select %p264, %s263, 0
          %s266 = smul.u32 32, %s265
          %s267 = ssub.s32 1, %s266
          %s268 = smul.u32 16, %s267
        $region24: #{tpu_custom_call.1} parent=15 // pred_fallthru
          _
      $region16: #{tpu_custom_call.1} parent=5 // pred_fallthru
        _
      %p269 = scmp.le.s32.totalorder 1, %s24
      %p270 = scmp.lt.s32.totalorder %s24, 3
      %p271 = pnand %p269, %p270
      %p272 = pneg %p271
      // Predicated region
      $region25: #{tpu_custom_call.1} parent=5 // pred_check
        _
      $region26: #{tpu_custom_call.1} parent=5 // pred_check_branch
        %274 = sbr.rel (%p271) target = $region28
      $region27: #{tpu_custom_call.1} parent=5 // pred_region
        %s275 = ssub.s32 %s24, 1
        %s276 = sand.u32 %s55, 1
        %s277 = scalar_lea.sflag [#allocation3], %s276
        %s278 = sand.u32 %s55, 1
        %s279 = smul.addr %s278, 32
        %s280 = scalar_lea.vmem [#allocation2], %s279
        // Predicated region
        $region29: #{tpu_custom_call.1} parent=27 // pred_check
          %p281 = pneg %p68
        $region30: #{tpu_custom_call.1} parent=27 // pred_check_branch
          %283 = sbr.rel (%p281) target = $region32
        $region31: #{tpu_custom_call.1} parent=27 // pred_region
          %284 = dma.done %s277, 512
        $region32: #{tpu_custom_call.1} parent=27 // pred_fallthru
          _
        %s285 = sand.u32 %s55, 1
        %s286 = scalar_lea.sflag [#allocation3], %s285
        %s287 = sand.u32 %s55, 1
        %s288 = smul.addr %s287, 32
        %s289 = scalar_lea.vmem [#allocation2], %s288
        %p290 = pneg %p68
        %p291 = pneg %p65
        %s292 = sadd.s32 %s33, %s34
        %p293 = scmp.lt.s32.totalorder %s292, 0
        %s294 = scalar_select %p293, %s292, 0
        %s295 = smul.u32 32, %s294
        %s296 = ssub.s32 1, %s295
        %s297 = smul.u32 16, %s296
        %p298 = scmp.lt.s32.totalorder %s295, 0
        %s299 = scalar_select %p298, %s295, 0
        %s300 = scalar_lea.vmem %s1, %s299
        %p301 = pneg %p100
        %p302 = pneg %p97
        %p303 = pneg %p126
        %p304 = pneg %p123
        %s305 = sand.u32 %s113, 1
        %s306 = scalar_lea.sflag [#allocation4], %s305
        %s307 = sand.u32 %s113, 1
        %s308 = smul.addr %s307, 8
        %s309 = scalar_lea.vmem [#allocation5], %s308
        %p310 = pneg %p152
        %p311 = pneg %p149
        %s312 = sand.u32 %s29, 1
        %s313 = scalar_lea.sflag [#allocation7], %s312
        %s314 = sand.u32 %s139, 1
        %s315 = smul.addr %s314, 8
        %s316 = scalar_lea.vmem [#allocation6], %s315
        %p317 = pneg %p178
        %p318 = pneg %p175
        %s319 = sand.u32 %s29, 1
        %s320 = scalar_lea.sflag [#allocation7], %s319
        %s321 = sand.u32 %s165, 1
        %s322 = smul.addr %s321, 8
        %s323 = scalar_lea.vmem [#allocation8], %s322
        %p324 = pneg %p204
        %p325 = pneg %p201
        %s326 = sand.u32 %s191, 1
        %s327 = scalar_lea.sflag [#allocation10], %s326
        %s328 = sand.u32 %s191, 1
        %s329 = smul.addr %s328, 8
        %s330 = scalar_lea.vmem [#allocation9], %s329
        %s331 = sadd.s32 %s33, %s34
        %p332 = scmp.lt.s32.totalorder %s331, 0
        %s333 = scalar_select %p332, %s331, 0
        %s334 = smul.u32 16, %s333
        %s335 = ssub.s32 1, %s334
        %s336 = smul.u32 32, %s335
        %s337 = sadd.s32 %s33, %s34
        %p338 = scmp.lt.s32.totalorder %s337, 0
        %s339 = scalar_select %p338, %s337, 0
        %s340 = smul.u32 32, %s339
        %s341 = ssub.s32 1, %s340
        %s342 = smul.u32 16, %s341
        %p343 = scmp.lt.s32.totalorder %s340, 0
        %s344 = scalar_select %p343, %s340, 0
        %s345 = scalar_lea.vmem %s1, %s344
        %s346 = sadd.s32 %s33, %s34
        %p347 = scmp.lt.s32.totalorder %s346, 0
        %s348 = scalar_select %p347, %s346, 0
        %s349 = smul.u32 32, %s348
        %s350 = ssub.s32 1, %s349
        %s351 = smul.u32 16, %s350
        %s352 = sadd.s32 %s33, %s34
        %p353 = scmp.eq.s32.totalorder %s34, 0
        // Predicated region
        $region33: #{tpu_custom_call.1} parent=27 // pred_check
          %p354 = pneg %p353
        $region34: #{tpu_custom_call.1} parent=27 // pred_check_branch
          %356 = sbr.rel (%p354) target = $region36
        $region35: #{tpu_custom_call.1} parent=27 // pred_region
          %357 = vst [vmem:[%s309] sm:$0xff] -1e+30
          %358 = vst [vmem:[%s316] sm:$0xff] 0.0
          %359 = vst [vmem:[%s323] sm:$0xff] -1e+30
          %360 = vst [vmem:[%s330] sm:$0xff] 0.0
        $region36: #{tpu_custom_call.1} parent=27 // pred_fallthru
          _
        %p361 = scmp.lt.s32.totalorder %s352, 0
        // Predicated region
        $region37: #{tpu_custom_call.1} parent=27 // pred_check
          %p362 = pneg %p361
        $region38: #{tpu_custom_call.1} parent=27 // pred_check_branch
          %364 = sbr.rel (%p362) target = $region40
        $region39: #{tpu_custom_call.1} parent=27 // pred_region
          %v365 = vld [vmem:[%s280] sm:$0xff]
          %v366 = vld [vmem:[%s280 + $0x8] sm:$0xff]
          %v367 = vld [vmem:[%s280 + $0x10] sm:$0xff]
          %v368 = vld [vmem:[%s280 + $0x18] sm:$0xff]
          %v369 = vsub.f32 2.0, %v365
          %v370 = vsub.f32 2.0, %v366
          %v371 = vsub.f32 2.0, %v367
          %v372 = vsub.f32 2.0, %v368
          %v373 = vmax.f32 %v369, 0.0
          %v374 = vmax.f32 %v370, 0.0
          %v375 = vmax.f32 %v371, 0.0
          %v376 = vmax.f32 %v372, 0.0
          %v377 = vmul.f32 %v373, -32.0
          %v378 = vmul.f32 %v374, -32.0
          %v379 = vmul.f32 %v375, -32.0
          %v380 = vmul.f32 %v376, -32.0
          %v381 = vmul.f32 %v377, %v365
          %v382 = vmul.f32 %v378, %v366
          %v383 = vmul.f32 %v379, %v367
          %v384 = vmul.f32 %v380, %v368
          %v385 = vmax.f32 %v381, %v382
          %v386 = vmax.f32 %v383, %v384
          %v387 = vmax.f32 %v385, %v386
          %v388 = vsub.f32 %v381, %v387
          %v389 = vsub.f32 %v382, %v387
          %v390 = vsub.f32 %v383, %v387
          %v391 = vsub.f32 %v384, %v387
          %v392 = vmul.f32 %v388, 1.442695
          %v393 = vpow.pop %v392
          %v394 = vmul.f32 %v389, 1.442695
          %v395 = vpow.pop %v394
          %v396 = vmul.f32 %v390, 1.442695
          %v397 = vpow.pop %v396
          %v398 = vmul.f32 %v391, 1.442695
          %v399 = vpow.pop %v398
          %v400 = vadd.f32 %v393, %v395
          %v401 = vadd.f32 %v400, %v397
          %v402 = vadd.f32 %v401, %v399
          %v403 = vld [vmem:[%s309] sm:$0xff]
          %v404 = vsub.f32 %v387, %v403
          %v405 = vand.u32 2147483647, %v404
          %v406 = vsub.f32 0.0, %v405
          %v407 = vmul.f32 %v406, 1.442695
          %v408 = vpow.pop %v407
          %vm409 = vcmp.gt.f32.partialorder %v404, 0.0
          %v410 = vld [vmem:[%s316] sm:$0xff]
          %v411 = vmul.f32 %v410, %v408
          %v412 = vadd.f32 %v411, %v402
          %v413 = vmul.f32 %v402, %v408
          %v414 = vadd.f32 %v410, %v413
          %v415 = vsel %vm409, %v412, %v414
          %416 = vst [vmem:[%s316] sm:$0xff] %v415
          %v417 = vmax.f32 %v403, %v387
          %418 = vst [vmem:[%s309] sm:$0xff] %v417
        $region40: #{tpu_custom_call.1} parent=27 // pred_fallthru
          _
        %p419 = scmp.eq.s32.totalorder %s352, 0
        // Predicated region
        $region41: #{tpu_custom_call.1} parent=27 // pred_check
          %p420 = pneg %p419
        $region42: #{tpu_custom_call.1} parent=27 // pred_check_branch
          %422 = sbr.rel (%p420) target = $region44
        $region43: #{tpu_custom_call.1} parent=27 // pred_region
          %v423 = vld [vmem:[%s280] sm:$0xff]
          %v424 = vld [vmem:[%s280 + $0x8] sm:$0xff]
          %v425 = vld [vmem:[%s280 + $0x10] sm:$0xff]
          %v426 = vld [vmem:[%s280 + $0x18] sm:$0xff]
          %v427 = vsub.f32 2.0, %v423
          %v428 = vsub.f32 2.0, %v424
          %v429 = vsub.f32 2.0, %v425
          %v430 = vsub.f32 2.0, %v426
          %v431 = vmax.f32 %v427, 0.0
          %v432 = vmax.f32 %v428, 0.0
          %v433 = vmax.f32 %v429, 0.0
          %v434 = vmax.f32 %v430, 0.0
          %v435 = vmul.f32 %v431, -32.0
          %v436 = vmul.f32 %v432, -32.0
          %v437 = vmul.f32 %v433, -32.0
          %v438 = vmul.f32 %v434, -32.0
          %v439 = vmul.f32 %v435, %v423
          %v440 = vmul.f32 %v436, %v424
          %v441 = vmul.f32 %v437, %v425
          %v442 = vmul.f32 %v438, %v426
          %v443 = vlaneseq
          %v444 = vshrl.u32 %v443, 7
          %v445 = vadd.s32 %v444, 8
          %v446 = vadd.s32 %v444, 16
          %v447 = vadd.s32 %v444, 24
          %v448 = vlaneseq
          %v449 = vand.u32 %v448, 127
          %v450 = vmul.u32 %v444, 128
          %v451 = vmul.u32 %v445, 128
          %v452 = vmul.u32 %v446, 128
          %v453 = vmul.u32 %v447, 128
          %v454 = vadd.s32 %v450, %v449
          %v455 = vadd.s32 %v451, %v449
          %v456 = vadd.s32 %v452, %v449
          %v457 = vadd.s32 %v453, %v449
          %vm458 = vcmp.lt.s32.totalorder %v454, 256
          %vm459 = vcmp.lt.s32.totalorder %v455, 256
          %vm460 = vcmp.lt.s32.totalorder %v456, 256
          %vm461 = vcmp.lt.s32.totalorder %v457, 256
          %v462 = vsel %vm458, %v439, -1e+30
          %v463 = vsel %vm459, %v440, -1e+30
          %v464 = vsel %vm460, %v441, -1e+30
          %v465 = vsel %vm461, %v442, -1e+30
          %v466 = vmax.f32 %v462, %v463
          %v467 = vmax.f32 %v464, %v465
          %v468 = vmax.f32 %v466, %v467
          %v469 = vsub.f32 %v462, %v468
          %v470 = vsub.f32 %v463, %v468
          %v471 = vsub.f32 %v464, %v468
          %v472 = vsub.f32 %v465, %v468
          %v473 = vmul.f32 %v469, 1.442695
          %v474 = vpow.pop %v473
          %v475 = vmul.f32 %v470, 1.442695
          %v476 = vpow.pop %v475
          %v477 = vmul.f32 %v471, 1.442695
          %v478 = vpow.pop %v477
          %v479 = vmul.f32 %v472, 1.442695
          %v480 = vpow.pop %v479
          %v481 = vadd.f32 %v474, %v476
          %v482 = vadd.f32 %v481, %v478
          %v483 = vadd.f32 %v482, %v480
          %v484 = vld [vmem:[%s309] sm:$0xff]
          %v485 = vsub.f32 %v468, %v484
          %v486 = vand.u32 2147483647, %v485
          %v487 = vsub.f32 0.0, %v486
          %v488 = vmul.f32 %v487, 1.442695
          %v489 = vpow.pop %v488
          %vm490 = vcmp.gt.f32.partialorder %v485, 0.0
          %v491 = vld [vmem:[%s316] sm:$0xff]
          %v492 = vmul.f32 %v491, %v489
          %v493 = vadd.f32 %v492, %v483
          %v494 = vmul.f32 %v483, %v489
          %v495 = vadd.f32 %v491, %v494
          %v496 = vsel %vm490, %v493, %v495
          %497 = vst [vmem:[%s316] sm:$0xff] %v496
          %v498 = vmax.f32 %v484, %v468
          %499 = vst [vmem:[%s309] sm:$0xff] %v498
        $region44: #{tpu_custom_call.1} parent=27 // pred_fallthru
          _
        // Predicated region
        $region45: #{tpu_custom_call.1} parent=27 // pred_check
          %p500 = pneg %p361
        $region46: #{tpu_custom_call.1} parent=27 // pred_check_branch
          %502 = sbr.rel (%p500) target = $region48
        $region47: #{tpu_custom_call.1} parent=27 // pred_region
          %v503 = vld [vmem:[%s345] sm:$0xff]
          %v504 = vld [vmem:[%s345 + $0x8] sm:$0xff]
          %v505 = vld [vmem:[%s345 + $0x10] sm:$0xff]
          %v506 = vld [vmem:[%s345 + $0x18] sm:$0xff]
          %v507 = vadd.f32 %v503, 2.0
          %v508 = vadd.f32 %v504, 2.0
          %v509 = vadd.f32 %v505, 2.0
          %v510 = vadd.f32 %v506, 2.0
          %v511 = vmax.f32 %v507, 0.0
          %v512 = vmax.f32 %v508, 0.0
          %v513 = vmax.f32 %v509, 0.0
          %v514 = vmax.f32 %v510, 0.0
          %v515 = vmul.f32 %v511, 32.0
          %v516 = vmul.f32 %v512, 32.0
          %v517 = vmul.f32 %v513, 32.0
          %v518 = vmul.f32 %v514, 32.0
          %v519 = vmul.f32 %v515, %v503
          %v520 = vmul.f32 %v516, %v504
          %v521 = vmul.f32 %v517, %v505
          %v522 = vmul.f32 %v518, %v506
          %v523 = vmax.f32 %v519, %v520
          %v524 = vmax.f32 %v521, %v522
          %v525 = vmax.f32 %v523, %v524
          %v526 = vsub.f32 %v519, %v525
          %v527 = vsub.f32 %v520, %v525
          %v528 = vsub.f32 %v521, %v525
          %v529 = vsub.f32 %v522, %v525
          %v530 = vmul.f32 %v526, 1.442695
          %v531 = vpow.pop %v530
          %v532 = vmul.f32 %v527, 1.442695
          %v533 = vpow.pop %v532
          %v534 = vmul.f32 %v528, 1.442695
          %v535 = vpow.pop %v534
          %v536 = vmul.f32 %v529, 1.442695
          %v537 = vpow.pop %v536
          %v538 = vadd.f32 %v531, %v533
          %v539 = vadd.f32 %v538, %v535
          %v540 = vadd.f32 %v539, %v537
          %v541 = vld [vmem:[%s323] sm:$0xff]
          %v542 = vsub.f32 %v525, %v541
          %v543 = vand.u32 2147483647, %v542
          %v544 = vsub.f32 0.0, %v543
          %v545 = vmul.f32 %v544, 1.442695
          %v546 = vpow.pop %v545
          %vm547 = vcmp.gt.f32.partialorder %v542, 0.0
          %v548 = vld [vmem:[%s330] sm:$0xff]
          %v549 = vmul.f32 %v548, %v546
          %v550 = vadd.f32 %v549, %v540
          %v551 = vmul.f32 %v540, %v546
          %v552 = vadd.f32 %v548, %v551
          %v553 = vsel %vm547, %v550, %v552
          %554 = vst [vmem:[%s330] sm:$0xff] %v553
          %v555 = vmax.f32 %v541, %v525
          %556 = vst [vmem:[%s323] sm:$0xff] %v555
        $region48: #{tpu_custom_call.1} parent=27 // pred_fallthru
          _
        // Predicated region
        $region49: #{tpu_custom_call.1} parent=27 // pred_check
          %p557 = pneg %p419
        $region50: #{tpu_custom_call.1} parent=27 // pred_check_branch
          %559 = sbr.rel (%p557) target = $region52
        $region51: #{tpu_custom_call.1} parent=27 // pred_region
          %v560 = vld [vmem:[%s345] sm:$0xff]
          %v561 = vld [vmem:[%s345 + $0x8] sm:$0xff]
          %v562 = vld [vmem:[%s345 + $0x10] sm:$0xff]
          %v563 = vld [vmem:[%s345 + $0x18] sm:$0xff]
          %v564 = vadd.f32 %v560, 2.0
          %v565 = vadd.f32 %v561, 2.0
          %v566 = vadd.f32 %v562, 2.0
          %v567 = vadd.f32 %v563, 2.0
          %v568 = vmax.f32 %v564, 0.0
          %v569 = vmax.f32 %v565, 0.0
          %v570 = vmax.f32 %v566, 0.0
          %v571 = vmax.f32 %v567, 0.0
          %v572 = vmul.f32 %v568, 32.0
          %v573 = vmul.f32 %v569, 32.0
          %v574 = vmul.f32 %v570, 32.0
          %v575 = vmul.f32 %v571, 32.0
          %v576 = vmul.f32 %v572, %v560
          %v577 = vmul.f32 %v573, %v561
          %v578 = vmul.f32 %v574, %v562
          %v579 = vmul.f32 %v575, %v563
          %v580 = vlaneseq
          %v581 = vshrl.u32 %v580, 7
          %v582 = vadd.s32 %v581, 8
          %v583 = vadd.s32 %v581, 16
          %v584 = vadd.s32 %v581, 24
          %v585 = vlaneseq
          %v586 = vand.u32 %v585, 127
          %v587 = vmul.u32 %v581, 128
          %v588 = vmul.u32 %v582, 128
          %v589 = vmul.u32 %v583, 128
          %v590 = vmul.u32 %v584, 128
          %v591 = vadd.s32 %v587, %v586
          %v592 = vadd.s32 %v588, %v586
          %v593 = vadd.s32 %v589, %v586
          %v594 = vadd.s32 %v590, %v586
          %vm595 = vcmp.lt.s32.totalorder %v591, 128
          %vm596 = vcmp.lt.s32.totalorder %v592, 128
          %vm597 = vcmp.lt.s32.totalorder %v593, 128
          %vm598 = vcmp.lt.s32.totalorder %v594, 128
          %v599 = vsel %vm595, %v576, -1e+30
          %v600 = vsel %vm596, %v577, -1e+30
          %v601 = vsel %vm597, %v578, -1e+30
          %v602 = vsel %vm598, %v579, -1e+30
          %v603 = vmax.f32 %v599, %v600
          %v604 = vmax.f32 %v601, %v602
          %v605 = vmax.f32 %v603, %v604
          %v606 = vsub.f32 %v599, %v605
          %v607 = vsub.f32 %v600, %v605
          %v608 = vsub.f32 %v601, %v605
          %v609 = vsub.f32 %v602, %v605
          %v610 = vmul.f32 %v606, 1.442695
          %v611 = vpow.pop %v610
          %v612 = vmul.f32 %v607, 1.442695
          %v613 = vpow.pop %v612
          %v614 = vmul.f32 %v608, 1.442695
          %v615 = vpow.pop %v614
          %v616 = vmul.f32 %v609, 1.442695
          %v617 = vpow.pop %v616
          %v618 = vadd.f32 %v611, %v613
          %v619 = vadd.f32 %v618, %v615
          %v620 = vadd.f32 %v619, %v617
          %v621 = vld [vmem:[%s323] sm:$0xff]
          %v622 = vsub.f32 %v605, %v621
          %v623 = vand.u32 2147483647, %v622
          %v624 = vsub.f32 0.0, %v623
          %v625 = vmul.f32 %v624, 1.442695
          %v626 = vpow.pop %v625
          %vm627 = vcmp.gt.f32.partialorder %v622, 0.0
          %v628 = vld [vmem:[%s330] sm:$0xff]
          %v629 = vmul.f32 %v628, %v626
          %v630 = vadd.f32 %v629, %v620
          %v631 = vmul.f32 %v620, %v626
          %v632 = vadd.f32 %v628, %v631
          %v633 = vsel %vm627, %v630, %v632
          %634 = vst [vmem:[%s330] sm:$0xff] %v633
          %v635 = vmax.f32 %v621, %v605
          %636 = vst [vmem:[%s323] sm:$0xff] %v635
        $region52: #{tpu_custom_call.1} parent=27 // pred_fallthru
          _
        %s637 = sand.u32 %s113, 1
        %s638 = scalar_lea.sflag [#allocation4], %s637
        %s639 = sand.u32 %s113, 1
        %s640 = smul.addr %s639, 8
        %s641 = scalar_lea.vmem [#allocation5], %s640
        %s642 = sand.u32 %s29, 1
        %s643 = scalar_lea.sflag [#allocation7], %s642
        %s644 = sand.u32 %s139, 1
        %s645 = smul.addr %s644, 8
        %s646 = scalar_lea.vmem [#allocation6], %s645
        %s647 = sand.u32 %s29, 1
        %s648 = scalar_lea.sflag [#allocation7], %s647
        %s649 = sand.u32 %s165, 1
        %s650 = smul.addr %s649, 8
        %s651 = scalar_lea.vmem [#allocation8], %s650
        %s652 = sand.u32 %s191, 1
        %s653 = scalar_lea.sflag [#allocation10], %s652
        %s654 = sand.u32 %s191, 1
        %s655 = smul.addr %s654, 8
        %s656 = scalar_lea.vmem [#allocation9], %s655
        // Predicated region
        $region53: #{tpu_custom_call.1} parent=27 // pred_check
          %p657 = pneg %p123
        $region54: #{tpu_custom_call.1} parent=27 // pred_check_branch
          %659 = sbr.rel (%p657) target = $region56
        $region55: #{tpu_custom_call.1} parent=27 // pred_region
          %s661 = ssub.s32 128, 128
          %662 = vsyncadd %s638, %s661
          %s663 = smul.addr %s33, 128
          %s664 = scalar_lea.hbm %s2, %s663
          %s666 = sshll.u32 %s641, 4
          %s667 = int_to_ptr.vmem [resolvable:$true] %s666
          %669 = dma.vmem_to_hbm [thread:$0]  %s667, 128, %s664, %s638
        $region56: #{tpu_custom_call.1} parent=27 // pred_fallthru
          _
        // Predicated region
        $region57: #{tpu_custom_call.1} parent=27 // pred_check
          %p670 = pneg %p149
        $region58: #{tpu_custom_call.1} parent=27 // pred_check_branch
          %672 = sbr.rel (%p670) target = $region60
        $region59: #{tpu_custom_call.1} parent=27 // pred_region
          %s674 = ssub.s32 128, 128
          %675 = vsyncadd %s643, %s674
          %s676 = smul.addr %s33, 128
          %s677 = scalar_lea.hbm %s3, %s676
          %s679 = sshll.u32 %s646, 4
          %s680 = int_to_ptr.vmem [resolvable:$true] %s679
          %682 = dma.vmem_to_hbm [thread:$0]  %s680, 128, %s677, %s643
        $region60: #{tpu_custom_call.1} parent=27 // pred_fallthru
          _
        // Predicated region
        $region61: #{tpu_custom_call.1} parent=27 // pred_check
          %p683 = pneg %p175
        $region62: #{tpu_custom_call.1} parent=27 // pred_check_branch
          %685 = sbr.rel (%p683) target = $region64
        $region63: #{tpu_custom_call.1} parent=27 // pred_region
          %s687 = ssub.s32 128, 128
          %688 = vsyncadd %s648, %s687
          %s689 = smul.addr %s33, 128
          %s690 = scalar_lea.hbm %s4, %s689
          %s692 = sshll.u32 %s651, 4
          %s693 = int_to_ptr.vmem [resolvable:$true] %s692
          %695 = dma.vmem_to_hbm [thread:$0]  %s693, 128, %s690, %s648
        $region64: #{tpu_custom_call.1} parent=27 // pred_fallthru
          _
        // Predicated region
        $region65: #{tpu_custom_call.1} parent=27 // pred_check
          %p696 = pneg %p201
        $region66: #{tpu_custom_call.1} parent=27 // pred_check_branch
          %698 = sbr.rel (%p696) target = $region68
        $region67: #{tpu_custom_call.1} parent=27 // pred_region
          %s700 = ssub.s32 128, 128
          %701 = vsyncadd %s653, %s700
          %s702 = smul.addr %s33, 128
          %s703 = scalar_lea.hbm %s5, %s702
          %s705 = sshll.u32 %s656, 4
          %s706 = int_to_ptr.vmem [resolvable:$true] %s705
          %708 = dma.vmem_to_hbm [thread:$0]  %s706, 128, %s703, %s653
        $region68: #{tpu_custom_call.1} parent=27 // pred_fallthru
          _
      $region28: #{tpu_custom_call.1} parent=5 // pred_fallthru
        _
      %p709 = scmp.le.s32.totalorder 2, %s24
      // Predicated region
      $region69: #{tpu_custom_call.1} parent=5 // pred_check
        %p710 = pneg %p709
      $region70: #{tpu_custom_call.1} parent=5 // pred_check_branch
        %712 = sbr.rel (%p710) target = $region72
      $region71: #{tpu_custom_call.1} parent=5 // pred_region
        %s713 = ssub.s32 %s24, 2
        // Predicated region
        $region73: #{tpu_custom_call.1} parent=71 // pred_check
          %p714 = pneg %p129
        $region74: #{tpu_custom_call.1} parent=71 // pred_check_branch
          %716 = sbr.rel (%p714) target = $region76
        $region75: #{tpu_custom_call.1} parent=71 // pred_region
          %s717 = sand.u32 %s114, 1
          %s718 = scalar_lea.sflag [#allocation4], %s717
          %s719 = sand.u32 %s114, 1
          %s720 = smul.addr %s719, 8
          %s721 = scalar_lea.vmem [#allocation5], %s720
          %722 = dma.done %s718, 128
        $region76: #{tpu_custom_call.1} parent=71 // pred_fallthru
          _
        // Predicated region
        $region77: #{tpu_custom_call.1} parent=71 // pred_check
          %p723 = pneg %p155
        $region78: #{tpu_custom_call.1} parent=71 // pred_check_branch
          %725 = sbr.rel (%p723) target = $region80
        $region79: #{tpu_custom_call.1} parent=71 // pred_region
          %s726 = sand.u32 %s30, 1
          %s727 = scalar_lea.sflag [#allocation7], %s726
          %s728 = sand.u32 %s140, 1
          %s729 = smul.addr %s728, 8
          %s730 = scalar_lea.vmem [#allocation6], %s729
          %731 = dma.done %s727, 128
        $region80: #{tpu_custom_call.1} parent=71 // pred_fallthru
          _
        // Predicated region
        $region81: #{tpu_custom_call.1} parent=71 // pred_check
          %p732 = pneg %p181
        $region82: #{tpu_custom_call.1} parent=71 // pred_check_branch
          %734 = sbr.rel (%p732) target = $region84
        $region83: #{tpu_custom_call.1} parent=71 // pred_region
          %s735 = sand.u32 %s30, 1
          %s736 = scalar_lea.sflag [#allocation7], %s735
          %s737 = sand.u32 %s166, 1
          %s738 = smul.addr %s737, 8
          %s739 = scalar_lea.vmem [#allocation8], %s738
          %740 = dma.done %s736, 128
        $region84: #{tpu_custom_call.1} parent=71 // pred_fallthru
          _
        // Predicated region
        $region85: #{tpu_custom_call.1} parent=71 // pred_check
          %p741 = pneg %p207
        $region86: #{tpu_custom_call.1} parent=71 // pred_check_branch
          %743 = sbr.rel (%p741) target = $region88
        $region87: #{tpu_custom_call.1} parent=71 // pred_region
          %s744 = sand.u32 %s192, 1
          %s745 = scalar_lea.sflag [#allocation10], %s744
          %s746 = sand.u32 %s192, 1
          %s747 = smul.addr %s746, 8
          %s748 = scalar_lea.vmem [#allocation9], %s747
          %749 = dma.done %s745, 128
        $region88: #{tpu_custom_call.1} parent=71 // pred_fallthru
          _
      $region72: #{tpu_custom_call.1} parent=5 // pred_fallthru
        _
    $region6: #{tpu_custom_call.1} parent=1 // loop_footer
      %s28 = sadd.s32 1, %s24
    $region7: #{tpu_custom_call.1} parent=1 // loop_footer_branch
      %23 = sbr.rel target = $region3
    $region8: #{tpu_custom_call.1} parent=1 // loop_exit
      _
    %750 = vsyncpa [#allocation3], 1
    %s751 = scalar_lea.sflag [#allocation3], 1
    %752 = vsyncpa %s751, 1
    %753 = vsyncpa [#allocation4], 1
    %s754 = scalar_lea.sflag [#allocation4], 1
    %755 = vsyncpa %s754, 1
    %756 = vsyncpa [#allocation7], 1
    %s757 = scalar_lea.sflag [#allocation7], 1
    %758 = vsyncpa %s757, 1
    %759 = vsyncpa [#allocation10], 1
    %s760 = scalar_lea.sflag [#allocation10], 1
    %761 = vsyncpa %s760, 1

</llo_original>
